<compile_context>
chip_gen: v7x
topology: tpu7x:2x2x1
jax: 0.10.0
libtpu: 0.0.40
codegen_flags: <defaults>
</compile_context>

<pallas_src>
import jax
import jax.numpy as jnp
from jax.experimental import pallas as pl
from jax.experimental.pallas import tpu as pltpu

THRESHOLD = 1.0  # SpikingNeuron(threshold=1.0)
LANE = 128
SUBLANE = 8


def _round_up(n, m):
    return ((n + m - 1) // m) * m


def _vmem_budget_bytes():
    """~82% of physical per-core VMEM (≈52 MiB on v7x, ≈104 MiB on v5e/v6e)."""
    phys = 64 * 1024 * 1024  # conservative fallback = v7x size
    try:
        phys = int(pltpu.get_tpu_info().vmem_capacity_bytes)
    except Exception:
        pass
    return (phys * 13) // 16


def _make_kernel(first_layer_bf16):
    def snn_kernel(x_ref, w1_ref, b1_ref, w2_ref, b2_ref, o_ref):
        x = x_ref[...]
        if first_layer_bf16:
            # Cast in-kernel: x stays f32 in HBM (read once), cast is a cheap VPU op.
            x = x.astype(jnp.bfloat16)
        # First linear layer on the MXU with f32 accumulation.
        h = jnp.dot(x, w1_ref[...], preferred_element_type=jnp.float32)
        h = h + b1_ref[...]  # (1, Hp) bias broadcasts over batch rows

        # Spiking neuron: membrane = 0 + h; spike = (membrane >= threshold).
        # Values are exactly 0/1, so the bf16 cast for the second matmul is lossless.
        spike = jnp.where(h >= THRESHOLD, 1.0, 0.0).astype(jnp.bfloat16)

        # Second linear layer: bf16 x bf16 -> f32 accumulate on the MXU.
        out = jnp.dot(spike, w2_ref[...], preferred_element_type=jnp.float32)
        o_ref[...] = out + b2_ref[...]

    return snn_kernel


def prepare_params(w1, b1, w2, b2, *, first_layer_bf16=True):
    """Pad H/O to the 128-lane grain and cast ONCE (hoisted out of the forward).

    w1: [In, H], b1: [H] or [1, H], w2: [H, O], b2: [O] or [1, O].
    Zero padding is exact: padded hidden columns get h = 0 < threshold -> spike 0,
    and padded w2 rows / output columns are zero, so results slice back unchanged.
    """
    In, H = w1.shape
    O = w2.shape[1]
    Hp = _round_up(H, LANE)
    Op = _round_up(O, LANE)
    w1_dt = jnp.bfloat16 if first_layer_bf16 else jnp.float32
    w1_p = jnp.pad(w1.astype(jnp.float32), ((0, 0), (0, Hp - H))).astype(w1_dt)
    b1_p = jnp.pad(b1.astype(jnp.float32).reshape(1, -1), ((0, 0), (0, Hp - H)))
    w2_p = jnp.pad(w2.astype(jnp.float32), ((0, Hp - H), (0, Op - O))).astype(jnp.bfloat16)
    b2_p = jnp.pad(b2.astype(jnp.float32).reshape(1, -1), ((0, 0), (0, Op - O)))
    return {"w1": w1_p, "b1": b1_p, "w2": w2_p, "b2": b2_p, "out_features": O}


def _resident_spec(shape, single_buffer):
    """BlockSpec for a grid-invariant (VMEM-resident) operand."""
    if single_buffer:
        try:
            return pl.BlockSpec(shape, lambda i: (0, 0), pipeline_mode=pl.Buffered(1))
        except TypeError:  # older jax without pipeline_mode on BlockSpec
            pass
    return pl.BlockSpec(shape, lambda i: (0, 0))


def snn_forward(x, params, *, max_block_b=2048):
    """x: [B, In] float32; params from prepare_params -> [B, out_features] float32."""
    w1_p, b1_p, w2_p, b2_p = params["w1"], params["b1"], params["w2"], params["b2"]
    O = params["out_features"]
    B, In = x.shape
    assert w1_p.shape[0] == In
    Hp = w1_p.shape[1]
    Op = w2_p.shape[1]
    first_layer_bf16 = w1_p.dtype == jnp.bfloat16
    x_bytes = x.dtype.itemsize

    # ---- generation-aware VMEM budget and batch-tile sizing -------------------
    budget = _vmem_budget_bytes()
    fixed = (w1_p.size * w1_p.dtype.itemsize + b1_p.size * b1_p.dtype.itemsize
             + w2_p.size * w2_p.dtype.itemsize + b2_p.size * b2_p.dtype.itemsize)
    per_row = (2 * In * x_bytes          # double-buffered x tile
               + 2 * Op * 4              # double-buffered out tile
               + In * 2                  # in-kernel bf16 copy of the x tile
               + Hp * 4 + Hp * 2         # h (f32) + spike (bf16) intermediates
               + Op * 4)                 # second-matmul result before the store
    # Budget weights at 2x as headroom in case single-buffering is not honored.
    tb_cap = max(SUBLANE, min(max_block_b, (budget - 2 * fixed) // per_row))
    tb_cap = max(SUBLANE, (tb_cap // SUBLANE) * SUBLANE)

    # Minimal batch padding: round B up to the sublane grain, then split into the
    # fewest tiles that fit; force >=2 steps when possible so v7x's two TensorCores
    # can both be used via the "parallel" grid axis (near-free on v5e/v6e).
    B_su = _round_up(B, SUBLANE)
    steps = -(-B_su // tb_cap)
    if steps == 1 and B_su >= 2 * SUBLANE:
        steps = 2
    tb = _round_up(-(-B_su // steps), SUBLANE)
    B_pad = steps * tb
    x_in = x if B_pad == B else jnp.pad(x, ((0, B_pad - B), (0, 0)))

    need = 2 * fixed + tb * per_row + (4 << 20)  # + headroom for compiler scratch
    vmem_limit = int(min(budget, max(need, 32 << 20)))

    flops = 2 * B_pad * (In * Hp + Hp * Op)
    bytes_accessed = (x_in.size * x_bytes + fixed + B_pad * Op * 4)
    cost = pl.CostEstimate(flops=flops, transcendentals=0, bytes_accessed=bytes_accessed)

    def _run(single_buffer):
        call = pl.pallas_call(
            _make_kernel(first_layer_bf16),
            out_shape=jax.ShapeDtypeStruct((B_pad, Op), jnp.float32),
            grid_spec=pltpu.PrefetchScalarGridSpec(
                num_scalar_prefetch=0,
                grid=(steps,),
                in_specs=[
                    pl.BlockSpec((tb, In), lambda i: (i, 0)),    # x tile per batch step
                    _resident_spec((In, Hp), single_buffer),     # w1 resident
                    _resident_spec((1, Hp), single_buffer),      # b1 resident
                    _resident_spec((Hp, Op), single_buffer),     # w2 (bf16) resident
                    _resident_spec((1, Op), single_buffer),      # b2 resident
                ],
                out_specs=pl.BlockSpec((tb, Op), lambda i: (i, 0)),
            ),
            compiler_params=pltpu.CompilerParams(
                dimension_semantics=("parallel",),
                vmem_limit_bytes=vmem_limit,
            ),
            cost_estimate=cost,
        )
        return call(x_in, w1_p, b1_p, w2_p, b2_p)

    try:
        out_p = _run(single_buffer=True)
    except Exception:
        # pl.Buffered(1) not supported on this jax/libtpu -> default double buffering.
        out_p = _run(single_buffer=False)

    return out_p[:B, :O]


def init_linear_params(key, in_features, out_features):
    """Deterministic init mimicking nn.Linear: U(-1/sqrt(in), 1/sqrt(in)).
    Weight returned already transposed to [in_features, out_features]."""
    kw, kb = jax.random.split(key)
    bound = 1.0 / jnp.sqrt(jnp.float32(in_features))
    w = jax.random.uniform(kw, (in_features, out_features), jnp.float32, -bound, bound)
    b = jax.random.uniform(kb, (1, out_features), jnp.float32, -bound, bound)
    return w, b


if __name__ == "__main__":
    # Small shapes consistent with SNN(input_size, hidden_size, output_size).
    batch, input_size, hidden_size, output_size = 8, 16, 32, 8

    key = jax.random.PRNGKey(0)
    k_x, k_l1, k_l2 = jax.random.split(key, 3)

    x = jax.random.normal(k_x, (batch, input_size), jnp.float32)
    w1, b1 = init_linear_params(k_l1, input_size, hidden_size)
    w2, b2 = init_linear_params(k_l2, hidden_size, output_size)

    params = prepare_params(w1, b1, w2, b2)          # pad / cast once (hoisted)
    out = snn_forward(x, params)
    out = jax.block_until_ready(out)

    # Reference using the same bf16 casts the kernel uses (spike is exactly 0/1,
    # f32 accumulation on the MXU), so the comparison is apples-to-apples.
    h_ref = jnp.dot(x.astype(jnp.bfloat16), w1.astype(jnp.bfloat16),
                    preferred_element_type=jnp.float32) + b1
    spike_ref = (h_ref >= THRESHOLD).astype(jnp.float32)
    ref = jnp.dot(spike_ref.astype(jnp.bfloat16), w2.astype(jnp.bfloat16),
                  preferred_element_type=jnp.float32) + b2

    assert out.shape == (batch, output_size)
    assert jnp.allclose(out, ref, atol=2e-2, rtol=2e-2), float(jnp.abs(out - ref).max())

    print("KERNEL_OK")
</pallas_src>

<mosaic_0001>
module attributes {stable_mosaic.version = 11 : i64} {
  func.func @snn_kernel(%arg0: i32, %arg1: memref<8x16xf32, #tpu.memory_space<vmem>>, %arg2: memref<16x128xbf16, #tpu.memory_space<vmem>>, %arg3: memref<1x128xf32, #tpu.memory_space<vmem>>, %arg4: memref<128x128xbf16, #tpu.memory_space<vmem>>, %arg5: memref<1x128xf32, #tpu.memory_space<vmem>>, %arg6: memref<8x128xf32, #tpu.memory_space<vmem>>) attributes {dimension_semantics = [#tpu.dimension_semantics<parallel>], iteration_bounds = array<i64: 1>, scalar_prefetch = 0 : i64, scratch_operands = 0 : i64, tpu.core_type = #tpu.core_type<tc>, window_params = [{transform_indices = @transform_0, window_bounds = array<i64: 8, 16>}, {pipeline_mode = #tpu.pipeline_mode<synchronous>, transform_indices = @transform_1, window_bounds = array<i64: 16, 128>}, {pipeline_mode = #tpu.pipeline_mode<synchronous>, transform_indices = @transform_2, window_bounds = array<i64: 1, 128>}, {pipeline_mode = #tpu.pipeline_mode<synchronous>, transform_indices = @transform_3, window_bounds = array<i64: 128, 128>}, {pipeline_mode = #tpu.pipeline_mode<synchronous>, transform_indices = @transform_4, window_bounds = array<i64: 1, 128>}, {transform_indices = @transform_5, window_bounds = array<i64: 8, 128>}]} {
    %c0 = arith.constant 0 : index
    %c0_0 = arith.constant 0 : index
    %0 = vector.load %arg1[%c0, %c0_0] : memref<8x16xf32, #tpu.memory_space<vmem>>, vector<8x16xf32>
    %1 = arith.truncf %0 : vector<8x16xf32> to vector<8x16xbf16>
    %c0_1 = arith.constant 0 : index
    %c0_2 = arith.constant 0 : index
    %2 = vector.load %arg2[%c0_1, %c0_2] : memref<16x128xbf16, #tpu.memory_space<vmem>>, vector<16x128xbf16>
    %cst = arith.constant dense<0.000000e+00> : vector<8x128xf32>
    %3 = tpu.matmul %1, %2, %cst {dimension_numbers = #tpu.dot_dimension_numbers<[1], [0], [0], [1], [0, 0, 1, 1], [], []>} : vector<8x16xbf16>, vector<16x128xbf16>, vector<8x128xf32> -> vector<8x128xf32>
    %c0_3 = arith.constant 0 : index
    %c0_4 = arith.constant 0 : index
    %4 = vector.load %arg3[%c0_3, %c0_4] : memref<1x128xf32, #tpu.memory_space<vmem>>, vector<1x128xf32>
    %5 = vector.broadcast %4 : vector<1x128xf32> to vector<8x128xf32>
    %6 = arith.addf %3, %5 : vector<8x128xf32>
    %cst_5 = arith.constant 1.000000e+00 : f32
    %7 = vector.broadcast %cst_5 : f32 to vector<8x128xf32>
    %8 = arith.cmpf oge, %6, %7 : vector<8x128xf32>
    %cst_6 = arith.constant 1.000000e+00 : f32
    %cst_7 = arith.constant 0.000000e+00 : f32
    %9 = vector.broadcast %cst_6 : f32 to vector<8x128xf32>
    %10 = vector.broadcast %cst_7 : f32 to vector<8x128xf32>
    %11 = arith.select %8, %9, %10 : vector<8x128xi1>, vector<8x128xf32>
    %12 = arith.truncf %11 : vector<8x128xf32> to vector<8x128xbf16>
    %c0_8 = arith.constant 0 : index
    %c0_9 = arith.constant 0 : index
    %13 = vector.load %arg4[%c0_8, %c0_9] : memref<128x128xbf16, #tpu.memory_space<vmem>>, vector<128x128xbf16>
    %cst_10 = arith.constant dense<0.000000e+00> : vector<8x128xf32>
    %14 = tpu.matmul %12, %13, %cst_10 {dimension_numbers = #tpu.dot_dimension_numbers<[1], [0], [0], [1], [0, 0, 1, 1], [], []>} : vector<8x128xbf16>, vector<128x128xbf16>, vector<8x128xf32> -> vector<8x128xf32>
    %c0_11 = arith.constant 0 : index
    %c0_12 = arith.constant 0 : index
    %15 = vector.load %arg5[%c0_11, %c0_12] : memref<1x128xf32, #tpu.memory_space<vmem>>, vector<1x128xf32>
    %16 = vector.broadcast %15 : vector<1x128xf32> to vector<8x128xf32>
    %17 = arith.addf %14, %16 : vector<8x128xf32>
    %c0_13 = arith.constant 0 : index
    %c0_14 = arith.constant 0 : index
    %18 = vector.load %arg6[%c0_13, %c0_14] : memref<8x128xf32, #tpu.memory_space<vmem>>, vector<8x128xf32>
    tpu.vector_store %arg6[%c0_13, %c0_14], %17 {strides = array<i32>} : memref<8x128xf32, #tpu.memory_space<vmem>>, vector<8x128xf32>,
    return
  }
  func.func @transform_0(%arg0: i32) -> (i32, i32) {
    %c0_i32 = arith.constant 0 : i32
    %c0_i32_0 = arith.constant 0 : i32
    return %arg0, %c0_i32 : i32, i32
  }
  func.func @transform_1(%arg0: i32) -> (i32, i32) {
    %c0_i32 = arith.constant 0 : i32
    %c0_i32_0 = arith.constant 0 : i32
    %c0_i32_1 = arith.constant 0 : i32
    return %c0_i32, %c0_i32_0 : i32, i32
  }
  func.func @transform_2(%arg0: i32) -> (i32, i32) {
    %c0_i32 = arith.constant 0 : i32
    %c0_i32_0 = arith.constant 0 : i32
    %c0_i32_1 = arith.constant 0 : i32
    return %c0_i32, %c0_i32_0 : i32, i32
  }
  func.func @transform_3(%arg0: i32) -> (i32, i32) {
    %c0_i32 = arith.constant 0 : i32
    %c0_i32_0 = arith.constant 0 : i32
    %c0_i32_1 = arith.constant 0 : i32
    return %c0_i32, %c0_i32_0 : i32, i32
  }
  func.func @transform_4(%arg0: i32) -> (i32, i32) {
    %c0_i32 = arith.constant 0 : i32
    %c0_i32_0 = arith.constant 0 : i32
    %c0_i32_1 = arith.constant 0 : i32
    return %c0_i32, %c0_i32_0 : i32, i32
  }
  func.func @transform_5(%arg0: i32) -> (i32, i32) {
    %c0_i32 = arith.constant 0 : i32
    %c0_i32_0 = arith.constant 0 : i32
    return %arg0, %c0_i32 : i32, i32
  }
}

module attributes {stable_mosaic.version = 11 : i64} {
  func.func @snn_kernel(%arg0: i32, %arg1: memref<8x16xf32, #tpu.memory_space<vmem>>, %arg2: memref<16x128xbf16, #tpu.memory_space<vmem>>, %arg3: memref<1x128xf32, #tpu.memory_space<vmem>>, %arg4: memref<128x128xbf16, #tpu.memory_space<vmem>>, %arg5: memref<1x128xf32, #tpu.memory_space<vmem>>, %arg6: memref<8x128xf32, #tpu.memory_space<vmem>>) attributes {dimension_semantics = [#tpu.dimension_semantics<parallel>], iteration_bounds = array<i64: 1>, scalar_prefetch = 0 : i64, scratch_operands = 0 : i64, tpu.core_type = #tpu.core_type<tc>, window_params = [{transform_indices = @transform_0, window_bounds = array<i64: 8, 16>}, {pipeline_mode = #tpu.pipeline_mode<synchronous>, transform_indices = @transform_1, window_bounds = array<i64: 16, 128>}, {pipeline_mode = #tpu.pipeline_mode<synchronous>, transform_indices = @transform_2, window_bounds = array<i64: 1, 128>}, {pipeline_mode = #tpu.pipeline_mode<synchronous>, transform_indices = @transform_3, window_bounds = array<i64: 128, 128>}, {pipeline_mode = #tpu.pipeline_mode<synchronous>, transform_indices = @transform_4, window_bounds = array<i64: 1, 128>}, {transform_indices = @transform_5, window_bounds = array<i64: 8, 128>}]} {
    %c0 = arith.constant 0 : index
    %c0_0 = arith.constant 0 : index
    %0 = vector.load %arg1[%c0, %c0_0] : memref<8x16xf32, #tpu.memory_space<vmem>>, vector<8x16xf32>
    %1 = arith.truncf %0 : vector<8x16xf32> to vector<8x16xbf16>
    %c0_1 = arith.constant 0 : index
    %c0_2 = arith.constant 0 : index
    %2 = vector.load %arg2[%c0_1, %c0_2] : memref<16x128xbf16, #tpu.memory_space<vmem>>, vector<16x128xbf16>
    %cst = arith.constant dense<0.000000e+00> : vector<8x128xf32>
    %3 = tpu.matmul %1, %2, %cst {dimension_numbers = #tpu.dot_dimension_numbers<[1], [0], [0], [1], [0, 0, 1, 1], [], []>} : vector<8x16xbf16>, vector<16x128xbf16>, vector<8x128xf32> -> vector<8x128xf32>
    %c0_3 = arith.constant 0 : index
    %c0_4 = arith.constant 0 : index
    %4 = vector.load %arg3[%c0_3, %c0_4] : memref<1x128xf32, #tpu.memory_space<vmem>>, vector<1x128xf32>
    %5 = vector.broadcast %4 : vector<1x128xf32> to vector<8x128xf32>
    %6 = arith.addf %3, %5 : vector<8x128xf32>
    %cst_5 = arith.constant 1.000000e+00 : f32
    %7 = vector.broadcast %cst_5 : f32 to vector<8x128xf32>
    %8 = arith.cmpf oge, %6, %7 : vector<8x128xf32>
    %cst_6 = arith.constant 1.000000e+00 : f32
    %cst_7 = arith.constant 0.000000e+00 : f32
    %9 = vector.broadcast %cst_6 : f32 to vector<8x128xf32>
    %10 = vector.broadcast %cst_7 : f32 to vector<8x128xf32>
    %11 = arith.select %8, %9, %10 : vector<8x128xi1>, vector<8x128xf32>
    %12 = arith.truncf %11 : vector<8x128xf32> to vector<8x128xbf16>
    %c0_8 = arith.constant 0 : index
    %c0_9 = arith.constant 0 : index
    %13 = vector.load %arg4[%c0_8, %c0_9] : memref<128x128xbf16, #tpu.memory_space<vmem>>, vector<128x128xbf16>
    %cst_10 = arith.constant dense<0.000000e+00> : vector<8x128xf32>
    %14 = tpu.matmul %12, %13, %cst_10 {dimension_numbers = #tpu.dot_dimension_numbers<[1], [0], [0], [1], [0, 0, 1, 1], [], []>} : vector<8x128xbf16>, vector<128x128xbf16>, vector<8x128xf32> -> vector<8x128xf32>
    %c0_11 = arith.constant 0 : index
    %c0_12 = arith.constant 0 : index
    %15 = vector.load %arg5[%c0_11, %c0_12] : memref<1x128xf32, #tpu.memory_space<vmem>>, vector<1x128xf32>
    %16 = vector.broadcast %15 : vector<1x128xf32> to vector<8x128xf32>
    %17 = arith.addf %14, %16 : vector<8x128xf32>
    %c0_13 = arith.constant 0 : index
    %c0_14 = arith.constant 0 : index
    %18 = vector.load %arg6[%c0_13, %c0_14] : memref<8x128xf32, #tpu.memory_space<vmem>>, vector<8x128xf32>
    tpu.vector_store %arg6[%c0_13, %c0_14], %17 {strides = array<i32>} : memref<8x128xf32, #tpu.memory_space<vmem>>, vector<8x128xf32>,
    return
  }
  func.func @transform_0(%arg0: i32) -> (i32, i32) {
    %c0_i32 = arith.constant 0 : i32
    %c0_i32_0 = arith.constant 0 : i32
    return %arg0, %c0_i32 : i32, i32
  }
  func.func @transform_1(%arg0: i32) -> (i32, i32) {
    %c0_i32 = arith.constant 0 : i32
    %c0_i32_0 = arith.constant 0 : i32
    %c0_i32_1 = arith.constant 0 : i32
    return %c0_i32, %c0_i32_0 : i32, i32
  }
  func.func @transform_2(%arg0: i32) -> (i32, i32) {
    %c0_i32 = arith.constant 0 : i32
    %c0_i32_0 = arith.constant 0 : i32
    %c0_i32_1 = arith.constant 0 : i32
    return %c0_i32, %c0_i32_0 : i32, i32
  }
  func.func @transform_3(%arg0: i32) -> (i32, i32) {
    %c0_i32 = arith.constant 0 : i32
    %c0_i32_0 = arith.constant 0 : i32
    %c0_i32_1 = arith.constant 0 : i32
    return %c0_i32, %c0_i32_0 : i32, i32
  }
  func.func @transform_4(%arg0: i32) -> (i32, i32) {
    %c0_i32 = arith.constant 0 : i32
    %c0_i32_0 = arith.constant 0 : i32
    %c0_i32_1 = arith.constant 0 : i32
    return %c0_i32, %c0_i32_0 : i32, i32
  }
  func.func @transform_5(%arg0: i32) -> (i32, i32) {
    %c0_i32 = arith.constant 0 : i32
    %c0_i32_0 = arith.constant 0 : i32
    return %arg0, %c0_i32 : i32, i32
  }
}

</mosaic_0001>

<llo_original>
// kernel: tpu_custom_call.1
$region0: #{tpu_custom_call.1}
  #allocation0 [shape = 'u32[]', space=smem, size = 0x4, offset = 0x4, fixed_abs, tag = 'smem constant byte address 0x4 - core index']
  #allocation1 [shape = 'u32[144,128]{1,0:T(1,128)}', space=vmem, size = 0x12000, scoped, tag = 'internal scratch']
  %s0 = inlined_call_operand.hbm [shape: f32[8,16], index: 0, kind: input, shape index: {}]
  %s1 = inlined_call_operand.hbm [shape: bf16[16,128], index: 1, kind: input, shape index: {}]
  %s2 = inlined_call_operand.vmem [shape: f32[1,128], index: 2, kind: input, shape index: {}]
  %s3 = inlined_call_operand.hbm [shape: bf16[128,128], index: 3, kind: input, shape index: {}]
  %s4 = inlined_call_operand.vmem [shape: f32[1,128], index: 4, kind: input, shape index: {}]
  %s5 = inlined_call_operand.hbm [shape: f32[8,128], index: 5, kind: output, shape index: {}]
  %s6 = sld [smem:[#allocation0]]
  $region42: #{tpu_custom_call.1} parent=0
    _
  %s8 = ssub.s32 1, %s6
  %s9 = scalar_select 0, %s8, %s6
  $region1: #{tpu_custom_call.1} parent=0
    #allocation2 [shape = 'u8[4096]{0}', space=vmem, size = 0x1000, scoped, tag = 'input window, operand 0, single buffered']
    #allocation3 [shape = 's32[1]{0}', space=sflag, size = 0x4, scoped, tag = 'scoped memory for tpu_custom_call.1']
    #allocation4 [shape = 's32[1]{0}', space=sflag, size = 0x4, scoped, tag = 'scoped memory for tpu_custom_call.1']
    #allocation5 [shape = 'u8[4096]{0}', space=vmem, size = 0x1000, scoped, tag = 'input window, operand 1, single buffered']
    #allocation6 [shape = 's32[1]{0}', space=sflag, size = 0x4, scoped, tag = 'scoped memory for tpu_custom_call.1']
    #allocation7 [shape = 'u8[32768]{0}', space=vmem, size = 0x8000, scoped, tag = 'input window, operand 3, single buffered']
    #allocation8 [shape = 'u8[4096]{0}', space=vmem, size = 0x1000, scoped, tag = 'output window, operand 0, single buffered']
    %10 = vsyncpa [#allocation3], 0
    %11 = vsyncpa [#allocation6], 0
    %12 = vsyncpa [#allocation4], 0
    // Predicated region
    $region2: #{tpu_custom_call.1} parent=1 // pred_check
      _
    $region3: #{tpu_custom_call.1} parent=1 // pred_check_branch
      %14 = sbr.rel (0) target = $region5
    $region4: #{tpu_custom_call.1} parent=1 // pred_region
      %s16 = ssub.s32 128, 128
      %17 = vsyncadd [#allocation3], %s16
      %s19 = sshll.u32 [#allocation2], 4
      %s20 = int_to_ptr.vmem [resolvable:$true] %s19
      %22 = dma.hbm_to_vmem [thread:$0]  %s0, 128, %s20, [#allocation3]
    $region5: #{tpu_custom_call.1} parent=1 // pred_fallthru
      _
    // Predicated region
    $region6: #{tpu_custom_call.1} parent=1 // pred_check
      _
    $region7: #{tpu_custom_call.1} parent=1 // pred_check_branch
      %24 = sbr.rel (0) target = $region9
    $region8: #{tpu_custom_call.1} parent=1 // pred_region
      %s26 = ssub.s32 128, 128
      %27 = vsyncadd [#allocation6], %s26
      %s28 = sshll.u32 [#allocation5], 4
      %s29 = int_to_ptr.vmem [resolvable:$true] %s28
      %34 = dma.hbm_to_vmem [thread:$0]  %s1, 128, %s29, [#allocation6], 64, 64, 4
    $region9: #{tpu_custom_call.1} parent=1 // pred_fallthru
      _
    // Predicated region
    $region10: #{tpu_custom_call.1} parent=1 // pred_check
      _
    $region11: #{tpu_custom_call.1} parent=1 // pred_check_branch
      %36 = sbr.rel (0) target = $region13
    $region12: #{tpu_custom_call.1} parent=1 // pred_region
      _
    $region13: #{tpu_custom_call.1} parent=1 // pred_fallthru
      _
    // Predicated region
    $region14: #{tpu_custom_call.1} parent=1 // pred_check
      _
    $region15: #{tpu_custom_call.1} parent=1 // pred_check_branch
      %38 = sbr.rel (0) target = $region17
    $region16: #{tpu_custom_call.1} parent=1 // pred_region
      %s40 = ssub.s32 1024, 1024
      %41 = vsyncadd [#allocation6], %s40
      %s42 = sshll.u32 [#allocation7], 4
      %s43 = int_to_ptr.vmem [resolvable:$true] %s42
      %48 = dma.hbm_to_vmem [thread:$0]  %s3, 1024, %s43, [#allocation6], 64, 64, 4
    $region17: #{tpu_custom_call.1} parent=1 // pred_fallthru
      _
    // Predicated region
    $region18: #{tpu_custom_call.1} parent=1 // pred_check
      _
    $region19: #{tpu_custom_call.1} parent=1 // pred_check_branch
      %50 = sbr.rel (0) target = $region21
    $region20: #{tpu_custom_call.1} parent=1 // pred_region
      _
    $region21: #{tpu_custom_call.1} parent=1 // pred_fallthru
      _
    // Predicated region
    $region22: #{tpu_custom_call.1} parent=1 // pred_check
      _
    $region23: #{tpu_custom_call.1} parent=1 // pred_check_branch
      %52 = sbr.rel (0) target = $region25
    $region24: #{tpu_custom_call.1} parent=1 // pred_region
      %53 = dma.done [#allocation3], 128
    $region25: #{tpu_custom_call.1} parent=1 // pred_fallthru
      _
    // Predicated region
    $region26: #{tpu_custom_call.1} parent=1 // pred_check
      _
    $region27: #{tpu_custom_call.1} parent=1 // pred_check_branch
      %55 = sbr.rel (0) target = $region29
    $region28: #{tpu_custom_call.1} parent=1 // pred_region
      %56 = dma.done [#allocation6], 128
    $region29: #{tpu_custom_call.1} parent=1 // pred_fallthru
      _
    // Predicated region
    $region30: #{tpu_custom_call.1} parent=1 // pred_check
      _
    $region31: #{tpu_custom_call.1} parent=1 // pred_check_branch
      %58 = sbr.rel (0) target = $region33
    $region32: #{tpu_custom_call.1} parent=1 // pred_region
      %59 = dma.done [#allocation6], 1024
    $region33: #{tpu_custom_call.1} parent=1 // pred_fallthru
      _
    %v61 = vld [vmem:[#allocation2] sm:$0xff]
    %v62 = vpack.c.bf16 %v61, %v61
    %v63 = vld [vmem:[#allocation5] sm:$0xf]
    %v64 = vld [vmem:[#allocation5 + $0x4] sm:$0xf]
    %v65 = vld [vmem:[%s2] sm:$0x1]
    %v67 = vlaneseq
    %v68 = vshrl.u32 %v67, 7
    %v69 = vsub.s32 0, %v68
    %v70 = vrot.slane %v65, %v69
    %v74 = vunpack.c.l.b16 %v63
    %v75 = vunpack.c.l.b16 %v64
    %v76 = vpack.c.b16 %v75, %v74
    %vm78 = vcmask 130048
    %v80 = vsel %vm78, %v62, 0
    %82 = vmatprep.subr.bf16.mxu0 0
    %83 = vmatpush1.bf16.msra.mxu0 %v76
    %84 = vmatprep.subr.bf16.mxu0 0
    %85 = vmatpush1.bf16.msra.mxu0 0
    %86 = vmatprep.subr.bf16.mxu0 0
    %87 = vmatpush1.bf16.msra.mxu0 0
    %88 = vmatprep.subr.bf16.mxu0 0
    %89 = vmatpush1.bf16.msra.mxu0 0
    %90 = vmatprep.subr.bf16.mxu0 0
    %91 = vmatpush1.bf16.msra.mxu0 0
    %92 = vmatprep.subr.bf16.mxu0 0
    %93 = vmatpush1.bf16.msra.mxu0 0
    %94 = vmatprep.subr.bf16.mxu0 0
    %95 = vmatpush1.bf16.msra.mxu0 0
    %96 = vmatprep.subr.bf16.mxu0 0
    %97 = vmatpush1.bf16.msra.mxu0 0
    %98 = vmatprep.subr.bf16.mxu0 0
    %99 = vmatpush1.bf16.msra.mxu0 0
    %100 = vmatprep.subr.bf16.mxu0 0
    %101 = vmatpush1.bf16.msra.mxu0 0
    %102 = vmatprep.subr.bf16.mxu0 0
    %103 = vmatpush1.bf16.msra.mxu0 0
    %104 = vmatprep.subr.bf16.mxu0 0
    %105 = vmatpush1.bf16.msra.mxu0 0
    %106 = vmatprep.subr.bf16.mxu0 0
    %107 = vmatpush1.bf16.msra.mxu0 0
    %108 = vmatprep.subr.bf16.mxu0 0
    %109 = vmatpush1.bf16.msra.mxu0 0
    %110 = vmatprep.subr.bf16.mxu0 0
    %111 = vmatpush1.bf16.msra.mxu0 0
    %112 = vmatprep.subr.bf16.mxu0 0
    %113 = vmatpush1.bf16.msra.mxu0 0
    %114 = vmatprep.mubr.bf16.mxu0 0
    %115 = vmatmul.mubr.bf16.gmra.mrb[0].mxu0 %v80
    %v116 = vpop.f32.mrb[0].mxu0
    %v117 = vadd.f32 %v70, %v116
    %v118 = vpop.f32.mrb[0].mxu0
    %v119 = vpop.f32.mrb[0].mxu0
    %v120 = vpop.f32.mrb[0].mxu0
    %121 = vdwg.mxu0
    %vm122 = vcmp.ge.f32.partialorder %v117, 1.0
    %v123 = vsel %vm122, 1.0, 0.0
    %v124 = vpack.c.bf16 %v123, %v123
    %v125 = vld [vmem:[#allocation7] sm:$0xf]
    %v126 = vld [vmem:[#allocation7 + $0x4] sm:$0xf]
    %v127 = vld [vmem:[#allocation7 + $0x8] sm:$0xf]
    %v128 = vld [vmem:[#allocation7 + $0xc] sm:$0xf]
    %v129 = vld [vmem:[#allocation7 + $0x10] sm:$0xf]
    %v130 = vld [vmem:[#allocation7 + $0x14] sm:$0xf]
    %v131 = vld [vmem:[#allocation7 + $0x18] sm:$0xf]
    %v132 = vld [vmem:[#allocation7 + $0x1c] sm:$0xf]
    %v133 = vld [vmem:[#allocation7 + $0x20] sm:$0xf]
    %v134 = vld [vmem:[#allocation7 + $0x24] sm:$0xf]
    %v135 = vld [vmem:[#allocation7 + $0x28] sm:$0xf]
    %v136 = vld [vmem:[#allocation7 + $0x2c] sm:$0xf]
    %v137 = vld [vmem:[#allocation7 + $0x30] sm:$0xf]
    %v138 = vld [vmem:[#allocation7 + $0x34] sm:$0xf]
    %v139 = vld [vmem:[#allocation7 + $0x38] sm:$0xf]
    %v140 = vld [vmem:[#allocation7 + $0x3c] sm:$0xf]
    %v141 = vld [vmem:[%s4] sm:$0x1]
    %v143 = vlaneseq
    %v144 = vshrl.u32 %v143, 7
    %v145 = vsub.s32 0, %v144
    %v146 = vrot.slane %v141, %v145
    %v164 = vunpack.c.l.b16 %v125
    %v165 = vunpack.c.l.b16 %v126
    %v166 = vunpack.c.l.b16 %v127
    %v167 = vunpack.c.l.b16 %v128
    %v168 = vunpack.c.l.b16 %v129
    %v169 = vunpack.c.l.b16 %v130
    %v170 = vunpack.c.l.b16 %v131
    %v171 = vunpack.c.l.b16 %v132
    %v172 = vunpack.c.l.b16 %v133
    %v173 = vunpack.c.l.b16 %v134
    %v174 = vunpack.c.l.b16 %v135
    %v175 = vunpack.c.l.b16 %v136
    %v176 = vunpack.c.l.b16 %v137
    %v177 = vunpack.c.l.b16 %v138
    %v178 = vunpack.c.l.b16 %v139
    %v179 = vunpack.c.l.b16 %v140
    %v180 = vpack.c.b16 %v165, %v164
    %v181 = vpack.c.b16 %v167, %v166
    %v182 = vpack.c.b16 %v169, %v168
    %v183 = vpack.c.b16 %v171, %v170
    %v184 = vpack.c.b16 %v173, %v172
    %v185 = vpack.c.b16 %v175, %v174
    %v186 = vpack.c.b16 %v177, %v176
    %v187 = vpack.c.b16 %v179, %v178
    %196 = vmatprep.subr.bf16.mxu0 0
    %197 = vmatpush1.bf16.msra.mxu0 %v180
    %198 = vmatprep.subr.bf16.mxu0 0
    %199 = vmatpush1.bf16.msra.mxu0 %v181
    %200 = vmatprep.subr.bf16.mxu0 0
    %201 = vmatpush1.bf16.msra.mxu0 %v182
    %202 = vmatprep.subr.bf16.mxu0 0
    %203 = vmatpush1.bf16.msra.mxu0 %v183
    %204 = vmatprep.subr.bf16.mxu0 0
    %205 = vmatpush1.bf16.msra.mxu0 %v184
    %206 = vmatprep.subr.bf16.mxu0 0
    %207 = vmatpush1.bf16.msra.mxu0 %v185
    %208 = vmatprep.subr.bf16.mxu0 0
    %209 = vmatpush1.bf16.msra.mxu0 %v186
    %210 = vmatprep.subr.bf16.mxu0 0
    %211 = vmatpush1.bf16.msra.mxu0 %v187
    %212 = vmatprep.subr.bf16.mxu0 0
    %213 = vmatpush1.bf16.msra.mxu0 0
    %214 = vmatprep.subr.bf16.mxu0 0
    %215 = vmatpush1.bf16.msra.mxu0 0
    %216 = vmatprep.subr.bf16.mxu0 0
    %217 = vmatpush1.bf16.msra.mxu0 0
    %218 = vmatprep.subr.bf16.mxu0 0
    %219 = vmatpush1.bf16.msra.mxu0 0
    %220 = vmatprep.subr.bf16.mxu0 0
    %221 = vmatpush1.bf16.msra.mxu0 0
    %222 = vmatprep.subr.bf16.mxu0 0
    %223 = vmatpush1.bf16.msra.mxu0 0
    %224 = vmatprep.subr.bf16.mxu0 0
    %225 = vmatpush1.bf16.msra.mxu0 0
    %226 = vmatprep.subr.bf16.mxu0 0
    %227 = vmatpush1.bf16.msra.mxu0 0
    %228 = vmatprep.mubr.bf16.mxu0 0
    %229 = vmatmul.mubr.bf16.gmra.mrb[0].mxu0 %v124
    %v230 = vpop.f32.mrb[0].mxu0
    %v231 = vadd.f32 %v146, %v230
    %v232 = vpop.f32.mrb[0].mxu0
    %v233 = vpop.f32.mrb[0].mxu0
    %v234 = vpop.f32.mrb[0].mxu0
    %235 = vdwg.mxu0
    %236 = vst [vmem:[#allocation8] sm:$0xff] %v231
    // Predicated region
    $region34: #{tpu_custom_call.1} parent=1 // pred_check
      _
    $region35: #{tpu_custom_call.1} parent=1 // pred_check_branch
      %238 = sbr.rel (0) target = $region37
    $region36: #{tpu_custom_call.1} parent=1 // pred_region
      %s240 = ssub.s32 128, 128
      %241 = vsyncadd [#allocation4], %s240
      %s243 = sshll.u32 [#allocation8], 4
      %s244 = int_to_ptr.vmem [resolvable:$true] %s243
      %246 = dma.vmem_to_hbm [thread:$0]  %s244, 128, %s5, [#allocation4]
    $region37: #{tpu_custom_call.1} parent=1 // pred_fallthru
      _
    // Predicated region
    $region38: #{tpu_custom_call.1} parent=1 // pred_check
      _
    $region39: #{tpu_custom_call.1} parent=1 // pred_check_branch
      %248 = sbr.rel (0) target = $region41
    $region40: #{tpu_custom_call.1} parent=1 // pred_region
      %249 = dma.done [#allocation4], 128
    $region41: #{tpu_custom_call.1} parent=1 // pred_fallthru
      _
    %250 = vsyncpa [#allocation3], 1
    %251 = vsyncpa [#allocation6], 1
    %252 = vsyncpa [#allocation4], 1

// kernel: tpu_custom_call.1
$region0: #{tpu_custom_call.1}
  #allocation0 [shape = 'u32[]', space=smem, size = 0x4, offset = 0x4, fixed_abs, tag = 'smem constant byte address 0x4 - core index']
  #allocation1 [shape = 'u32[144,128]{1,0:T(1,128)}', space=vmem, size = 0x12000, scoped, tag = 'internal scratch']
  %s0 = inlined_call_operand.hbm [shape: f32[8,16], index: 0, kind: input, shape index: {}]
  %s1 = inlined_call_operand.hbm [shape: bf16[16,128], index: 1, kind: input, shape index: {}]
  %s2 = inlined_call_operand.vmem [shape: f32[1,128], index: 2, kind: input, shape index: {}]
  %s3 = inlined_call_operand.hbm [shape: bf16[128,128], index: 3, kind: input, shape index: {}]
  %s4 = inlined_call_operand.vmem [shape: f32[1,128], index: 4, kind: input, shape index: {}]
  %s5 = inlined_call_operand.hbm [shape: f32[8,128], index: 5, kind: output, shape index: {}]
  %s6 = sld [smem:[#allocation0]]
  $region42: #{tpu_custom_call.1} parent=0
    _
  %s8 = ssub.s32 1, %s6
  %s9 = scalar_select 0, %s8, %s6
  $region1: #{tpu_custom_call.1} parent=0
    #allocation2 [shape = 'u8[4096]{0}', space=vmem, size = 0x1000, scoped, tag = 'input window, operand 0, single buffered']
    #allocation3 [shape = 's32[1]{0}', space=sflag, size = 0x4, scoped, tag = 'scoped memory for tpu_custom_call.1']
    #allocation4 [shape = 's32[1]{0}', space=sflag, size = 0x4, scoped, tag = 'scoped memory for tpu_custom_call.1']
    #allocation5 [shape = 'u8[4096]{0}', space=vmem, size = 0x1000, scoped, tag = 'input window, operand 1, single buffered']
    #allocation6 [shape = 's32[1]{0}', space=sflag, size = 0x4, scoped, tag = 'scoped memory for tpu_custom_call.1']
    #allocation7 [shape = 'u8[32768]{0}', space=vmem, size = 0x8000, scoped, tag = 'input window, operand 3, single buffered']
    #allocation8 [shape = 'u8[4096]{0}', space=vmem, size = 0x1000, scoped, tag = 'output window, operand 0, single buffered']
    %10 = vsyncpa [#allocation3], 0
    %11 = vsyncpa [#allocation6], 0
    %12 = vsyncpa [#allocation4], 0
    // Predicated region
    $region2: #{tpu_custom_call.1} parent=1 // pred_check
      _
    $region3: #{tpu_custom_call.1} parent=1 // pred_check_branch
      %14 = sbr.rel (0) target = $region5
    $region4: #{tpu_custom_call.1} parent=1 // pred_region
      %s16 = ssub.s32 128, 128
      %17 = vsyncadd [#allocation3], %s16
      %s19 = sshll.u32 [#allocation2], 4
      %s20 = int_to_ptr.vmem [resolvable:$true] %s19
      %22 = dma.hbm_to_vmem [thread:$0]  %s0, 128, %s20, [#allocation3]
    $region5: #{tpu_custom_call.1} parent=1 // pred_fallthru
      _
    // Predicated region
    $region6: #{tpu_custom_call.1} parent=1 // pred_check
      _
    $region7: #{tpu_custom_call.1} parent=1 // pred_check_branch
      %24 = sbr.rel (0) target = $region9
    $region8: #{tpu_custom_call.1} parent=1 // pred_region
      %s26 = ssub.s32 128, 128
      %27 = vsyncadd [#allocation6], %s26
      %s28 = sshll.u32 [#allocation5], 4
      %s29 = int_to_ptr.vmem [resolvable:$true] %s28
      %34 = dma.hbm_to_vmem [thread:$0]  %s1, 128, %s29, [#allocation6], 64, 64, 4
    $region9: #{tpu_custom_call.1} parent=1 // pred_fallthru
      _
    // Predicated region
    $region10: #{tpu_custom_call.1} parent=1 // pred_check
      _
    $region11: #{tpu_custom_call.1} parent=1 // pred_check_branch
      %36 = sbr.rel (0) target = $region13
    $region12: #{tpu_custom_call.1} parent=1 // pred_region
      _
    $region13: #{tpu_custom_call.1} parent=1 // pred_fallthru
      _
    // Predicated region
    $region14: #{tpu_custom_call.1} parent=1 // pred_check
      _
    $region15: #{tpu_custom_call.1} parent=1 // pred_check_branch
      %38 = sbr.rel (0) target = $region17
    $region16: #{tpu_custom_call.1} parent=1 // pred_region
      %s40 = ssub.s32 1024, 1024
      %41 = vsyncadd [#allocation6], %s40
      %s42 = sshll.u32 [#allocation7], 4
      %s43 = int_to_ptr.vmem [resolvable:$true] %s42
      %48 = dma.hbm_to_vmem [thread:$0]  %s3, 1024, %s43, [#allocation6], 64, 64, 4
    $region17: #{tpu_custom_call.1} parent=1 // pred_fallthru
      _
    // Predicated region
    $region18: #{tpu_custom_call.1} parent=1 // pred_check
      _
    $region19: #{tpu_custom_call.1} parent=1 // pred_check_branch
      %50 = sbr.rel (0) target = $region21
    $region20: #{tpu_custom_call.1} parent=1 // pred_region
      _
    $region21: #{tpu_custom_call.1} parent=1 // pred_fallthru
      _
    // Predicated region
    $region22: #{tpu_custom_call.1} parent=1 // pred_check
      _
    $region23: #{tpu_custom_call.1} parent=1 // pred_check_branch
      %52 = sbr.rel (0) target = $region25
    $region24: #{tpu_custom_call.1} parent=1 // pred_region
      %53 = dma.done [#allocation3], 128
    $region25: #{tpu_custom_call.1} parent=1 // pred_fallthru
      _
    // Predicated region
    $region26: #{tpu_custom_call.1} parent=1 // pred_check
      _
    $region27: #{tpu_custom_call.1} parent=1 // pred_check_branch
      %55 = sbr.rel (0) target = $region29
    $region28: #{tpu_custom_call.1} parent=1 // pred_region
      %56 = dma.done [#allocation6], 128
    $region29: #{tpu_custom_call.1} parent=1 // pred_fallthru
      _
    // Predicated region
    $region30: #{tpu_custom_call.1} parent=1 // pred_check
      _
    $region31: #{tpu_custom_call.1} parent=1 // pred_check_branch
      %58 = sbr.rel (0) target = $region33
    $region32: #{tpu_custom_call.1} parent=1 // pred_region
      %59 = dma.done [#allocation6], 1024
    $region33: #{tpu_custom_call.1} parent=1 // pred_fallthru
      _
    %v61 = vld [vmem:[#allocation2] sm:$0xff]
    %v62 = vpack.c.bf16 %v61, %v61
    %v63 = vld [vmem:[#allocation5] sm:$0xf]
    %v64 = vld [vmem:[#allocation5 + $0x4] sm:$0xf]
    %v65 = vld [vmem:[%s2] sm:$0x1]
    %v67 = vlaneseq
    %v68 = vshrl.u32 %v67, 7
    %v69 = vsub.s32 0, %v68
    %v70 = vrot.slane %v65, %v69
    %v74 = vunpack.c.l.b16 %v63
    %v75 = vunpack.c.l.b16 %v64
    %v76 = vpack.c.b16 %v75, %v74
    %vm78 = vcmask 130048
    %v80 = vsel %vm78, %v62, 0
    %82 = vmatprep.subr.bf16.mxu0 0
    %83 = vmatpush1.bf16.msra.mxu0 %v76
    %84 = vmatprep.subr.bf16.mxu0 0
    %85 = vmatpush1.bf16.msra.mxu0 0
    %86 = vmatprep.subr.bf16.mxu0 0
    %87 = vmatpush1.bf16.msra.mxu0 0
    %88 = vmatprep.subr.bf16.mxu0 0
    %89 = vmatpush1.bf16.msra.mxu0 0
    %90 = vmatprep.subr.bf16.mxu0 0
    %91 = vmatpush1.bf16.msra.mxu0 0
    %92 = vmatprep.subr.bf16.mxu0 0
    %93 = vmatpush1.bf16.msra.mxu0 0
    %94 = vmatprep.subr.bf16.mxu0 0
    %95 = vmatpush1.bf16.msra.mxu0 0
    %96 = vmatprep.subr.bf16.mxu0 0
    %97 = vmatpush1.bf16.msra.mxu0 0
    %98 = vmatprep.subr.bf16.mxu0 0
    %99 = vmatpush1.bf16.msra.mxu0 0
    %100 = vmatprep.subr.bf16.mxu0 0
    %101 = vmatpush1.bf16.msra.mxu0 0
    %102 = vmatprep.subr.bf16.mxu0 0
    %103 = vmatpush1.bf16.msra.mxu0 0
    %104 = vmatprep.subr.bf16.mxu0 0
    %105 = vmatpush1.bf16.msra.mxu0 0
    %106 = vmatprep.subr.bf16.mxu0 0
    %107 = vmatpush1.bf16.msra.mxu0 0
    %108 = vmatprep.subr.bf16.mxu0 0
    %109 = vmatpush1.bf16.msra.mxu0 0
    %110 = vmatprep.subr.bf16.mxu0 0
    %111 = vmatpush1.bf16.msra.mxu0 0
    %112 = vmatprep.subr.bf16.mxu0 0
    %113 = vmatpush1.bf16.msra.mxu0 0
    %114 = vmatprep.mubr.bf16.mxu0 0
    %115 = vmatmul.mubr.bf16.gmra.mrb[0].mxu0 %v80
    %v116 = vpop.f32.mrb[0].mxu0
    %v117 = vadd.f32 %v70, %v116
    %v118 = vpop.f32.mrb[0].mxu0
    %v119 = vpop.f32.mrb[0].mxu0
    %v120 = vpop.f32.mrb[0].mxu0
    %121 = vdwg.mxu0
    %vm122 = vcmp.ge.f32.partialorder %v117, 1.0
    %v123 = vsel %vm122, 1.0, 0.0
    %v124 = vpack.c.bf16 %v123, %v123
    %v125 = vld [vmem:[#allocation7] sm:$0xf]
    %v126 = vld [vmem:[#allocation7 + $0x4] sm:$0xf]
    %v127 = vld [vmem:[#allocation7 + $0x8] sm:$0xf]
    %v128 = vld [vmem:[#allocation7 + $0xc] sm:$0xf]
    %v129 = vld [vmem:[#allocation7 + $0x10] sm:$0xf]
    %v130 = vld [vmem:[#allocation7 + $0x14] sm:$0xf]
    %v131 = vld [vmem:[#allocation7 + $0x18] sm:$0xf]
    %v132 = vld [vmem:[#allocation7 + $0x1c] sm:$0xf]
    %v133 = vld [vmem:[#allocation7 + $0x20] sm:$0xf]
    %v134 = vld [vmem:[#allocation7 + $0x24] sm:$0xf]
    %v135 = vld [vmem:[#allocation7 + $0x28] sm:$0xf]
    %v136 = vld [vmem:[#allocation7 + $0x2c] sm:$0xf]
    %v137 = vld [vmem:[#allocation7 + $0x30] sm:$0xf]
    %v138 = vld [vmem:[#allocation7 + $0x34] sm:$0xf]
    %v139 = vld [vmem:[#allocation7 + $0x38] sm:$0xf]
    %v140 = vld [vmem:[#allocation7 + $0x3c] sm:$0xf]
    %v141 = vld [vmem:[%s4] sm:$0x1]
    %v143 = vlaneseq
    %v144 = vshrl.u32 %v143, 7
    %v145 = vsub.s32 0, %v144
    %v146 = vrot.slane %v141, %v145
    %v164 = vunpack.c.l.b16 %v125
    %v165 = vunpack.c.l.b16 %v126
    %v166 = vunpack.c.l.b16 %v127
    %v167 = vunpack.c.l.b16 %v128
    %v168 = vunpack.c.l.b16 %v129
    %v169 = vunpack.c.l.b16 %v130
    %v170 = vunpack.c.l.b16 %v131
    %v171 = vunpack.c.l.b16 %v132
    %v172 = vunpack.c.l.b16 %v133
    %v173 = vunpack.c.l.b16 %v134
    %v174 = vunpack.c.l.b16 %v135
    %v175 = vunpack.c.l.b16 %v136
    %v176 = vunpack.c.l.b16 %v137
    %v177 = vunpack.c.l.b16 %v138
    %v178 = vunpack.c.l.b16 %v139
    %v179 = vunpack.c.l.b16 %v140
    %v180 = vpack.c.b16 %v165, %v164
    %v181 = vpack.c.b16 %v167, %v166
    %v182 = vpack.c.b16 %v169, %v168
    %v183 = vpack.c.b16 %v171, %v170
    %v184 = vpack.c.b16 %v173, %v172
    %v185 = vpack.c.b16 %v175, %v174
    %v186 = vpack.c.b16 %v177, %v176
    %v187 = vpack.c.b16 %v179, %v178
    %196 = vmatprep.subr.bf16.mxu0 0
    %197 = vmatpush1.bf16.msra.mxu0 %v180
    %198 = vmatprep.subr.bf16.mxu0 0
    %199 = vmatpush1.bf16.msra.mxu0 %v181
    %200 = vmatprep.subr.bf16.mxu0 0
    %201 = vmatpush1.bf16.msra.mxu0 %v182
    %202 = vmatprep.subr.bf16.mxu0 0
    %203 = vmatpush1.bf16.msra.mxu0 %v183
    %204 = vmatprep.subr.bf16.mxu0 0
    %205 = vmatpush1.bf16.msra.mxu0 %v184
    %206 = vmatprep.subr.bf16.mxu0 0
    %207 = vmatpush1.bf16.msra.mxu0 %v185
    %208 = vmatprep.subr.bf16.mxu0 0
    %209 = vmatpush1.bf16.msra.mxu0 %v186
    %210 = vmatprep.subr.bf16.mxu0 0
    %211 = vmatpush1.bf16.msra.mxu0 %v187
    %212 = vmatprep.subr.bf16.mxu0 0
    %213 = vmatpush1.bf16.msra.mxu0 0
    %214 = vmatprep.subr.bf16.mxu0 0
    %215 = vmatpush1.bf16.msra.mxu0 0
    %216 = vmatprep.subr.bf16.mxu0 0
    %217 = vmatpush1.bf16.msra.mxu0 0
    %218 = vmatprep.subr.bf16.mxu0 0
    %219 = vmatpush1.bf16.msra.mxu0 0
    %220 = vmatprep.subr.bf16.mxu0 0
    %221 = vmatpush1.bf16.msra.mxu0 0
    %222 = vmatprep.subr.bf16.mxu0 0
    %223 = vmatpush1.bf16.msra.mxu0 0
    %224 = vmatprep.subr.bf16.mxu0 0
    %225 = vmatpush1.bf16.msra.mxu0 0
    %226 = vmatprep.subr.bf16.mxu0 0
    %227 = vmatpush1.bf16.msra.mxu0 0
    %228 = vmatprep.mubr.bf16.mxu0 0
    %229 = vmatmul.mubr.bf16.gmra.mrb[0].mxu0 %v124
    %v230 = vpop.f32.mrb[0].mxu0
    %v231 = vadd.f32 %v146, %v230
    %v232 = vpop.f32.mrb[0].mxu0
    %v233 = vpop.f32.mrb[0].mxu0
    %v234 = vpop.f32.mrb[0].mxu0
    %235 = vdwg.mxu0
    %236 = vst [vmem:[#allocation8] sm:$0xff] %v231
    // Predicated region
    $region34: #{tpu_custom_call.1} parent=1 // pred_check
      _
    $region35: #{tpu_custom_call.1} parent=1 // pred_check_branch
      %238 = sbr.rel (0) target = $region37
    $region36: #{tpu_custom_call.1} parent=1 // pred_region
      %s240 = ssub.s32 128, 128
      %241 = vsyncadd [#allocation4], %s240
      %s243 = sshll.u32 [#allocation8], 4
      %s244 = int_to_ptr.vmem [resolvable:$true] %s243
      %246 = dma.vmem_to_hbm [thread:$0]  %s244, 128, %s5, [#allocation4]
    $region37: #{tpu_custom_call.1} parent=1 // pred_fallthru
      _
    // Predicated region
    $region38: #{tpu_custom_call.1} parent=1 // pred_check
      _
    $region39: #{tpu_custom_call.1} parent=1 // pred_check_branch
      %248 = sbr.rel (0) target = $region41
    $region40: #{tpu_custom_call.1} parent=1 // pred_region
      %249 = dma.done [#allocation4], 128
    $region41: #{tpu_custom_call.1} parent=1 // pred_fallthru
      _
    %250 = vsyncpa [#allocation3], 1
    %251 = vsyncpa [#allocation6], 1
    %252 = vsyncpa [#allocation4], 1

</llo_original>
